<compile_context>
chip_gen: v5e
topology: v5e:2x2
jax: 0.10.0
libtpu: 0.0.40
codegen_flags: <defaults>
</compile_context>

<pallas_src>
import jax
import jax.numpy as jnp
from jax.experimental import pallas as pl
from jax.experimental.pallas import tpu as pltpu


# ---------------------------------------------------------------------------
# Kernel
# ---------------------------------------------------------------------------
def _ada_norm_kernel(x_ref, w_ref, b_ref, out_ref):
    # x_ref:   (B, D_in)        VMEM-resident across all D_out tiles
    # w_ref:   (D_in, tn)       streamed per grid step (native weight dtype)
    # b_ref:   (num_tiles, tn)  VMEM-resident; row j holds bias[j*tn:(j+1)*tn]
    # out_ref: (B, tn)          lane-dense fused output tile
    x = x_ref[...].astype(jnp.float32)
    # SiLU on VPU/EUP; cast to the weight dtype so the MXU runs its native
    # (e.g. bf16) path.  Accumulation stays f32.
    h = (x * jax.nn.sigmoid(x)).astype(w_ref.dtype)
    acc = jnp.dot(h, w_ref[...], preferred_element_type=jnp.float32)
    b = b_ref[pl.ds(pl.program_id(0), 1), :].astype(jnp.float32)   # (1, tn)
    out_ref[...] = (acc + b).astype(out_ref.dtype)


# ---------------------------------------------------------------------------
# Tiling / VMEM sizing
# ---------------------------------------------------------------------------
_WEIGHT_VMEM_BUDGET = 40 << 20   # conservative: fits v7x's 64 MiB/TC VMEM


def _pick_tn(d_out, d_in, w_itemsize, *, tn_cap=2048,
             weight_vmem_budget=_WEIGHT_VMEM_BUDGET, num_w_buffers=3):
    """D_out tile width.

    Rules: full extent for small / non-128-multiple D_out (single tile, no
    masked stores); otherwise the largest 128-multiple divisor of D_out that
    (a) keeps `num_w_buffers` weight tiles under the VMEM budget and
    (b) preferably yields an EVEN tile count (v7x 2-TC load balance).
    Guarantees tn divides D_out -> no ragged tiles anywhere.
    """
    if d_out % 128 != 0 or d_out <= 256:
        return d_out
    by_vmem = weight_vmem_budget // max(1, num_w_buffers * d_in * w_itemsize)
    cap = max(128, min(tn_cap, (by_vmem // 128) * 128, d_out))
    divisors = [t for t in range(128, cap + 1, 128) if d_out % t == 0]
    even = [t for t in divisors if (d_out // t) % 2 == 0]
    return max(even) if even else max(divisors)


def _vmem_limit_bytes(B, d_in, tn, num_tiles, w_item, x_item, out_item,
                      num_w_buffers):
    pad_b = max(B, 8)
    need = (2 * pad_b * d_in * x_item                 # resident x
            + num_w_buffers * d_in * tn * w_item      # streamed weight tiles
            + 2 * max(num_tiles, 8) * tn * w_item     # resident bias
            + 2 * pad_b * tn * out_item)              # output tiles
    return int(min(64 << 20, max(32 << 20, need + (8 << 20))))


# ---------------------------------------------------------------------------
# Pallas forward + wrapper
# ---------------------------------------------------------------------------
def _pallas_forward(temb, weight, bias, *, tn_cap, weight_vmem_budget):
    B, D_in = temb.shape
    D_out = weight.shape[1]
    w_item = jnp.dtype(weight.dtype).itemsize
    x_item = jnp.dtype(temb.dtype).itemsize

    tn = _pick_tn(D_out, D_in, w_item, tn_cap=tn_cap,
                  weight_vmem_budget=weight_vmem_budget)
    assert D_out % tn == 0
    num_tiles = D_out // tn

    # Bias reshaped so row j is exactly this grid step's slice -> it stays
    # VMEM-resident (constant index_map) and is indexed by program_id.
    bias2d = bias.reshape(num_tiles, tn)

    # Weight tile spec: 3-deep pipelining when the grid is long enough.
    w_spec = pl.BlockSpec((D_in, tn), lambda j: (0, j))
    num_w_buffers = 2
    if num_tiles >= 3 and hasattr(pl, "Buffered"):
        try:
            w_spec = pl.BlockSpec((D_in, tn), lambda j: (0, j),
                                  pipeline_mode=pl.Buffered(3))
            num_w_buffers = 3
        except TypeError:
            pass  # older jax: keep default double-buffering

    vmem_limit = _vmem_limit_bytes(B, D_in, tn, num_tiles, w_item, x_item,
                                   x_item, num_w_buffers)

    cost = pl.CostEstimate(
        flops=2 * B * D_in * D_out,
        transcendentals=B * D_in,
        bytes_accessed=(D_in * D_out * w_item + B * D_in * x_item
                        + D_out * w_item + B * D_out * x_item))

    return pl.pallas_call(
        _ada_norm_kernel,
        out_shape=jax.ShapeDtypeStruct((B, D_out), temb.dtype),
        grid_spec=pltpu.PrefetchScalarGridSpec(
            num_scalar_prefetch=0,
            grid=(num_tiles,),
            in_specs=[
                # x: constant block index -> VMEM-resident, DMA'd once.
                pl.BlockSpec((B, D_in), lambda j: (0, 0)),
                # weight: streamed column tiles (the only real HBM traffic).
                w_spec,
                # bias: VMEM-resident, indexed in-kernel by program_id.
                pl.BlockSpec((num_tiles, tn), lambda j: (0, 0)),
            ],
            out_specs=pl.BlockSpec((B, tn), lambda j: (0, j)),
        ),
        compiler_params=pltpu.CompilerParams(
            dimension_semantics=("parallel",),
            vmem_limit_bytes=vmem_limit),
        cost_estimate=cost,
    )(temb, weight, bias2d)


def _fallback(temb, weight, bias):
    # Tiny-weight path: launch overhead would dominate a custom call; let XLA
    # fuse it.  HIGHEST precision costs nothing at the sizes this triggers on.
    x = temb.astype(jnp.float32)
    h = x * jax.nn.sigmoid(x)
    out = jnp.dot(h, weight.astype(jnp.float32),
                  precision=jax.lax.Precision.HIGHEST) + bias.astype(jnp.float32)
    return out.astype(temb.dtype)


def hunyuan_video_ada_norm(temb, weight, bias, *, min_weight_bytes=256 * 1024,
                           tn_cap=2048, weight_vmem_budget=_WEIGHT_VMEM_BUDGET):
    """temb: (B, D_in); weight: (D_in, D_out) (= PyTorch weight.T); bias: (D_out,).

    Returns (gate_msa, gate_mlp), each (B, 1, D_out // 2).
    """
    B, D_in = temb.shape
    assert weight.shape[0] == D_in
    D_out = weight.shape[1]
    assert D_out % 2 == 0
    d_half = D_out // 2

    w_bytes = D_in * D_out * jnp.dtype(weight.dtype).itemsize
    if w_bytes < min_weight_bytes:
        out = _fallback(temb, weight, bias)
    else:
        out = _pallas_forward(temb, weight, bias, tn_cap=tn_cap,
                              weight_vmem_budget=weight_vmem_budget)

    # chunk(2, dim=1) + unsqueeze(1): cheap XLA slices in the wrapper.
    gate_msa = out[:, None, :d_half]
    gate_mlp = out[:, None, d_half:]
    return gate_msa, gate_mlp


# ---------------------------------------------------------------------------
# Reference + tests
# ---------------------------------------------------------------------------
def _reference(temb, weight, bias):
    x = temb.astype(jnp.float32)
    h = x * jax.nn.sigmoid(x)
    out = jnp.dot(h, weight.astype(jnp.float32),
                  precision=jax.lax.Precision.HIGHEST) + bias.astype(jnp.float32)
    out = out.astype(temb.dtype)
    d_half = out.shape[-1] // 2
    return out[:, None, :d_half], out[:, None, d_half:]


def _make_params(key, B, d_in, d_out, dtype):
    k_t, k_w, k_b = jax.random.split(key, 3)
    temb = jax.random.normal(k_t, (B, d_in), dtype=jnp.float32).astype(dtype)
    weight = (jax.random.normal(k_w, (d_in, d_out), dtype=jnp.float32)
              * (1.0 / jnp.sqrt(d_in))).astype(dtype)
    bias = (jax.random.normal(k_b, (d_out,), dtype=jnp.float32) * 0.01).astype(dtype)
    return temb, weight, bias


if __name__ == "__main__":
    key = jax.random.PRNGKey(0)
    ks = jax.random.split(key, 3)

    # Tolerances for kernel-path checks accommodate MXU bf16-pass rounding of
    # the matmul vs. the HIGHEST-precision f32 XLA reference.
    F32_TOL = 2e-2
    BF16_TOL = 5e-2

    # Case 1: module default config (in_features=32 -> out_features=64), B=2.
    #   Weight is ~8 KB -> takes the fused-jnp fallback path.
    B, d_in = 2, 32
    d_out = 2 * d_in
    temb, w, b = _make_params(ks[0], B, d_in, d_out, jnp.float32)
    msa, mlp = hunyuan_video_ada_norm(temb, w, b)
    jax.block_until_ready((msa, mlp))
    r_msa, r_mlp = _reference(temb, w, b)
    assert msa.shape == (B, 1, d_in) and mlp.shape == (B, 1, d_in)
    assert jnp.allclose(msa, r_msa, atol=1e-5, rtol=1e-5)
    assert jnp.allclose(mlp, r_mlp, atol=1e-5, rtol=1e-5)

    # Case 2: same tiny shape forced through the Pallas kernel (single tile).
    msa2, mlp2 = hunyuan_video_ada_norm(temb, w, b, min_weight_bytes=0)
    jax.block_until_ready((msa2, mlp2))
    assert jnp.allclose(msa2, r_msa, atol=F32_TOL, rtol=F32_TOL)
    assert jnp.allclose(mlp2, r_mlp, atol=F32_TOL, rtol=F32_TOL)

    # Case 3: tiled D_out path, f32 weights: tn=512 -> 2 even "parallel" tiles.
    B3, din3, dout3 = 4, 256, 1024
    t3, w3, b3 = _make_params(ks[1], B3, din3, dout3, jnp.float32)
    m3, g3 = hunyuan_video_ada_norm(t3, w3, b3, min_weight_bytes=0)
    jax.block_until_ready((m3, g3))
    rm3, rg3 = _reference(t3, w3, b3)
    assert m3.shape == (B3, 1, dout3 // 2) and g3.shape == (B3, 1, dout3 // 2)
    assert jnp.allclose(m3, rm3, atol=F32_TOL, rtol=F32_TOL)
    assert jnp.allclose(g3, rg3, atol=F32_TOL, rtol=F32_TOL)

    # Case 4: bf16 weight stream, tn_cap=256 -> 4 tiles -> Buffered(3) path.
    B4, din4, dout4 = 2, 128, 1024
    t4, w4, b4 = _make_params(ks[2], B4, din4, dout4, jnp.bfloat16)
    m4, g4 = hunyuan_video_ada_norm(t4, w4, b4, min_weight_bytes=0, tn_cap=256)
    jax.block_until_ready((m4, g4))
    rm4, rg4 = _reference(t4, w4, b4)
    assert m4.shape == (B4, 1, dout4 // 2)
    assert jnp.allclose(m4.astype(jnp.float32), rm4.astype(jnp.float32),
                        atol=BF16_TOL, rtol=BF16_TOL)
    assert jnp.allclose(g4.astype(jnp.float32), rg4.astype(jnp.float32),
                        atol=BF16_TOL, rtol=BF16_TOL)

    print("KERNEL_OK")
</pallas_src>

<mosaic_0001>
module attributes {stable_mosaic.version = 11 : i64} {
  func.func @_ada_norm_kernel(%arg0: i32, %arg1: memref<2x32xf32, #tpu.memory_space<vmem>>, %arg2: memref<32x64xf32, #tpu.memory_space<vmem>>, %arg3: memref<1x64xf32, #tpu.memory_space<vmem>>, %arg4: memref<2x64xf32, #tpu.memory_space<vmem>>) attributes {dimension_semantics = [#tpu.dimension_semantics<parallel>], iteration_bounds = array<i64: 1>, scalar_prefetch = 0 : i64, scratch_operands = 0 : i64, tpu.core_type = #tpu.core_type<tc>, window_params = [{pipeline_mode = #tpu.pipeline_mode<synchronous>, transform_indices = @transform_0, window_bounds = array<i64: 2, 32>}, {transform_indices = @transform_1, window_bounds = array<i64: 32, 64>}, {pipeline_mode = #tpu.pipeline_mode<synchronous>, transform_indices = @transform_2, window_bounds = array<i64: 1, 64>}, {transform_indices = @transform_3, window_bounds = array<i64: 2, 64>}]} {
    %c0 = arith.constant 0 : index
    %c0_0 = arith.constant 0 : index
    %0 = vector.load %arg1[%c0, %c0_0] : memref<2x32xf32, #tpu.memory_space<vmem>>, vector<2x32xf32>
    %1 = arith.negf %0 : vector<2x32xf32>
    %2 = math.exp %1 : vector<2x32xf32>
    %cst = arith.constant 1.000000e+00 : f32
    %3 = vector.broadcast %cst : f32 to vector<2x32xf32>
    %4 = arith.addf %3, %2 : vector<2x32xf32>
    %5 = arith.divf %3, %4 : vector<2x32xf32>
    %6 = arith.mulf %0, %5 : vector<2x32xf32>
    %c0_1 = arith.constant 0 : index
    %c0_2 = arith.constant 0 : index
    %7 = vector.load %arg2[%c0_1, %c0_2] : memref<32x64xf32, #tpu.memory_space<vmem>>, vector<32x64xf32>
    %cst_3 = arith.constant dense<0.000000e+00> : vector<2x64xf32>
    %8 = tpu.matmul %6, %7, %cst_3 {dimension_numbers = #tpu.dot_dimension_numbers<[1], [0], [0], [1], [0, 0, 1, 1], [], []>} : vector<2x32xf32>, vector<32x64xf32>, vector<2x64xf32> -> vector<2x64xf32>
    %9 = arith.index_cast %arg0 : i32 to index
    %c0_4 = arith.constant 0 : index
    %10 = vector.load %arg3[%9, %c0_4] : memref<1x64xf32, #tpu.memory_space<vmem>>, vector<1x64xf32>
    %11 = vector.broadcast %10 : vector<1x64xf32> to vector<2x64xf32>
    %12 = arith.addf %8, %11 : vector<2x64xf32>
    %c0_5 = arith.constant 0 : index
    %c0_6 = arith.constant 0 : index
    %13 = vector.load %arg4[%c0_5, %c0_6] : memref<2x64xf32, #tpu.memory_space<vmem>>, vector<2x64xf32>
    tpu.vector_store %arg4[%c0_5, %c0_6], %12 {strides = array<i32>} : memref<2x64xf32, #tpu.memory_space<vmem>>, vector<2x64xf32>,
    return
  }
  func.func @transform_0(%arg0: i32) -> (i32, i32) {
    %c0_i32 = arith.constant 0 : i32
    %c0_i32_0 = arith.constant 0 : i32
    %c0_i32_1 = arith.constant 0 : i32
    return %c0_i32, %c0_i32_0 : i32, i32
  }
  func.func @transform_1(%arg0: i32) -> (i32, i32) {
    %c0_i32 = arith.constant 0 : i32
    %c0_i32_0 = arith.constant 0 : i32
    return %c0_i32, %arg0 : i32, i32
  }
  func.func @transform_2(%arg0: i32) -> (i32, i32) {
    %c0_i32 = arith.constant 0 : i32
    %c0_i32_0 = arith.constant 0 : i32
    %c0_i32_1 = arith.constant 0 : i32
    return %c0_i32, %c0_i32_0 : i32, i32
  }
  func.func @transform_3(%arg0: i32) -> (i32, i32) {
    %c0_i32 = arith.constant 0 : i32
    %c0_i32_0 = arith.constant 0 : i32
    return %c0_i32, %arg0 : i32, i32
  }
}

</mosaic_0001>

<llo_original>
// kernel: tpu_custom_call.1
$region0: #{tpu_custom_call.1}
  #allocation0 [shape = 'u32[]', space=smem, size = 0x4, offset = 0x4, fixed_abs, tag = 'smem constant byte address 0x4 - core index']
  #allocation1 [shape = 'u32[72,128]{1,0:T(1,128)}', space=vmem, size = 0x9000, scoped, tag = 'internal scratch']
  %s0 = inlined_call_operand.hbm [shape: f32[2,32], index: 0, kind: input, shape index: {}]
  %s1 = inlined_call_operand.hbm [shape: f32[32,64], index: 1, kind: input, shape index: {}]
  %s2 = inlined_call_operand.vmem [shape: f32[1,64], index: 2, kind: input, shape index: {}]
  %s3 = inlined_call_operand.hbm [shape: f32[2,64], index: 3, kind: output, shape index: {}]
  %s4 = sld [smem:[#allocation0]]
  $region30: #{tpu_custom_call.1} parent=0
    _
  %s6 = ssub.s32 1, %s4
  %s7 = scalar_select 0, %s6, %s4
  $region1: #{tpu_custom_call.1} parent=0
    #allocation2 [shape = 'u8[1024]{0}', space=vmem, size = 0x400, scoped, tag = 'input window, operand 0, single buffered']
    #allocation3 [shape = 's32[1]{0}', space=sflag, size = 0x4, scoped, tag = 'scoped memory for tpu_custom_call.1']
    #allocation4 [shape = 's32[1]{0}', space=sflag, size = 0x4, scoped, tag = 'scoped memory for tpu_custom_call.1']
    #allocation5 [shape = 'u8[16384]{0}', space=vmem, size = 0x4000, scoped, tag = 'input window, operand 1, single buffered']
    #allocation6 [shape = 's32[1]{0}', space=sflag, size = 0x4, scoped, tag = 'scoped memory for tpu_custom_call.1']
    #allocation7 [shape = 'u8[1024]{0}', space=vmem, size = 0x400, scoped, tag = 'output window, operand 0, single buffered']
    %8 = vsyncpa [#allocation3], 0
    %9 = vsyncpa [#allocation6], 0
    %10 = vsyncpa [#allocation4], 0
    // Predicated region
    $region2: #{tpu_custom_call.1} parent=1 // pred_check
      _
    $region3: #{tpu_custom_call.1} parent=1 // pred_check_branch
      %12 = sbr.rel (0) target = $region5
    $region4: #{tpu_custom_call.1} parent=1 // pred_region
      %14 = vsyncadd [#allocation3], 0
      %s16 = sshll.u32 %s0, 4
      %s17 = int_to_ptr.hbm [resolvable:$true] %s16
      %s18 = sshll.u32 [#allocation2], 4
      %s19 = int_to_ptr.vmem [resolvable:$true] %s18
      %21 = dma.hbm_to_vmem [thread:$0]  %s17, 32, %s19, [#allocation3]
    $region5: #{tpu_custom_call.1} parent=1 // pred_fallthru
      _
    // Predicated region
    $region6: #{tpu_custom_call.1} parent=1 // pred_check
      _
    $region7: #{tpu_custom_call.1} parent=1 // pred_check_branch
      %23 = sbr.rel (0) target = $region9
    $region8: #{tpu_custom_call.1} parent=1 // pred_region
      %25 = vsyncadd [#allocation6], 0
      %s26 = sshll.u32 %s1, 4
      %s27 = int_to_ptr.hbm [resolvable:$true] %s26
      %s28 = sshll.u32 [#allocation5], 4
      %s29 = int_to_ptr.vmem [resolvable:$true] %s28
      %34 = dma.hbm_to_vmem [thread:$0]  %s27, 512, %s29, [#allocation6], 128, 128, 8
    $region9: #{tpu_custom_call.1} parent=1 // pred_fallthru
      _
    // Predicated region
    $region10: #{tpu_custom_call.1} parent=1 // pred_check
      _
    $region11: #{tpu_custom_call.1} parent=1 // pred_check_branch
      %36 = sbr.rel (0) target = $region13
    $region12: #{tpu_custom_call.1} parent=1 // pred_region
      _
    $region13: #{tpu_custom_call.1} parent=1 // pred_fallthru
      _
    // Predicated region
    $region14: #{tpu_custom_call.1} parent=1 // pred_check
      _
    $region15: #{tpu_custom_call.1} parent=1 // pred_check_branch
      %38 = sbr.rel (0) target = $region17
    $region16: #{tpu_custom_call.1} parent=1 // pred_region
      %40 = dma.done [#allocation3], 32
    $region17: #{tpu_custom_call.1} parent=1 // pred_fallthru
      _
    // Predicated region
    $region18: #{tpu_custom_call.1} parent=1 // pred_check
      _
    $region19: #{tpu_custom_call.1} parent=1 // pred_check_branch
      %42 = sbr.rel (0) target = $region21
    $region20: #{tpu_custom_call.1} parent=1 // pred_region
      %44 = dma.done [#allocation6], 512
    $region21: #{tpu_custom_call.1} parent=1 // pred_fallthru
      _
    %v45 = vld [vmem:[#allocation2] sm:$0x3]
    %v46 = vxor.u32 %v45, 2147483648
    %v47 = vmul.f32 %v46, 1.442695
    %v48 = vpow.pop %v47
    %v49 = vadd.f32 %v48, 1.0
    %v50 = vrcp.pop %v49
    %v51 = vmul.f32 %v49, %v50
    %v52 = vsub.f32 1.0, %v51
    %v53 = vmul.f32 %v50, %v52
    %v54 = vadd.f32 %v50, %v53
    %vm55 = vweird.f32 %v49
    %vm56 = vweird.f32 %v50
    %vm57 = vmor %vm55, %vm56
    %v58 = vsel %vm57, %v50, %v54
    %v59 = vand.u32 2147483647, %v49
    %vm60 = vcmp.eq.f32.partialorder %v59, 8.507059e+37
    %v61 = vand.u32 %v49, 2147483648
    %v62 = vor.u32 1.1754944e-38, %v61
    %v63 = vsel %vm60, %v62, %v58
    %v64 = vmul.f32 1.0, %v63
    %v65 = vmul.f32 %v45, %v64
    %v66 = vld [vmem:[#allocation5] sm:$0xff]
    %v67 = vld [vmem:[#allocation5 + $0x8] sm:$0xff]
    %v68 = vld [vmem:[#allocation5 + $0x10] sm:$0xff]
    %v69 = vld [vmem:[#allocation5 + $0x18] sm:$0xff]
    %v70 = vld [vmem:[%s2] sm:$0x1]
    %v72 = vperm.slane %v70, 0
    %vm74 = vcmask 261120
    %v76 = vsel %vm74, %v65, 0
    %78 = vmatpush.msra.mxu0 0.0
    %79 = vmatpush.msra.mxu0 0.0
    %80 = vmatpush.msra.mxu0 0.0
    %81 = vmatpush.msra.mxu0 0.0
    %82 = vmatpush.msra.mxu0 0.0
    %83 = vmatpush.msra.mxu0 0.0
    %84 = vmatpush.msra.mxu0 0.0
    %85 = vmatpush.msra.mxu0 0.0
    %86 = vmatpush.msra.mxu0 0.0
    %87 = vmatpush.msra.mxu0 0.0
    %88 = vmatpush.msra.mxu0 0.0
    %89 = vmatpush.msra.mxu0 0.0
    %90 = vmatpush.msra.mxu0 %v69
    %91 = vmatpush.msra.mxu0 %v68
    %92 = vmatpush.msra.mxu0 %v67
    %93 = vmatpush.msra.mxu0 %v66
    %94 = vmatmul.f32.gmra.mxu0 %v76
    %v95 = vpop.f32.mrf.mxu0
    %v96 = vadd.f32 %v72, %v95
    %97 = vdwg.mxu0
    %vm98 = vcmask 517120
    %99 = vst.msk [vmem:[#allocation7] sm:$0x3] %vm98, %v96
    // Predicated region
    $region22: #{tpu_custom_call.1} parent=1 // pred_check
      _
    $region23: #{tpu_custom_call.1} parent=1 // pred_check_branch
      %101 = sbr.rel (0) target = $region25
    $region24: #{tpu_custom_call.1} parent=1 // pred_region
      %103 = vsyncadd [#allocation4], 0
      %s105 = sshll.u32 [#allocation7], 4
      %s106 = int_to_ptr.vmem [resolvable:$true] %s105
      %s107 = sshll.u32 %s3, 4
      %s108 = int_to_ptr.hbm [resolvable:$true] %s107
      %110 = dma.vmem_to_hbm [thread:$0]  %s106, 32, %s108, [#allocation4]
    $region25: #{tpu_custom_call.1} parent=1 // pred_fallthru
      _
    // Predicated region
    $region26: #{tpu_custom_call.1} parent=1 // pred_check
      _
    $region27: #{tpu_custom_call.1} parent=1 // pred_check_branch
      %112 = sbr.rel (0) target = $region29
    $region28: #{tpu_custom_call.1} parent=1 // pred_region
      %114 = dma.done [#allocation4], 32
    $region29: #{tpu_custom_call.1} parent=1 // pred_fallthru
      _
    %115 = vsyncpa [#allocation3], 1
    %116 = vsyncpa [#allocation6], 1
    %117 = vsyncpa [#allocation4], 1

</llo_original>
